<compile_context>
chip_gen: v7x
topology: tpu7x:2x2x1
jax: 0.10.0
libtpu: 0.0.40
codegen_flags: <defaults>
</compile_context>

<pallas_src>
import functools

import jax
import jax.numpy as jnp
import numpy as np
from jax import lax
from jax.experimental import pallas as pl
from jax.experimental.pallas import tpu as pltpu


def _se_kernel(tb, c, hwp, inv_hw, x_ref, ones_ref, w1_ref, w2t_ref, out_ref):
    """One grid step == TB batch elements.

    x_ref   : (TB, C, HWp)  input slab (channels on sublanes, spatial on lanes)
    ones_ref: (HWp, 1)      1.0 on valid spatial lanes, 0.0 on padded lanes
    w1_ref  : (Cr, C)       fc1 weight, PyTorch (out, in) layout (C on lanes)
    w2t_ref : (Cr, C)       fc2 weight, pre-transposed so C sits on lanes
    out_ref : (TB, C, HWp)
    """
    # squeeze: global average pool as an MXU mat-vec against the ones column.
    # Keeps the XLU free, accumulates in f32, and never upcasts the full slab.
    x2 = x_ref[...].reshape(tb * c, hwp)                       # input dtype
    colsum = jnp.dot(x2, ones_ref[...],
                     preferred_element_type=jnp.float32)       # (TB*C, 1) f32
    mean = colsum.reshape(tb, c) * inv_hw                      # (TB, C)   f32

    # excite: batched fc1 -> ReLU -> fc2 -> sigmoid (tiny, all f32 on MXU/EUP).
    h = lax.dot_general(mean, w1_ref[...],
                        dimension_numbers=(((1,), (1,)), ((), ())),
                        preferred_element_type=jnp.float32)    # (TB, Cr)
    h = jnp.maximum(h, 0.0)
    y = jnp.dot(h, w2t_ref[...],
                preferred_element_type=jnp.float32)            # (TB, C)
    s = jax.nn.sigmoid(y).astype(out_ref.dtype)                # (TB, C)

    # scale: re-read x (VMEM re-loads are cheap; avoids keeping the slab live
    # across the excite chain) and multiply in the input dtype.
    out_ref[...] = x_ref[...] * s[:, :, None]


def _vmem_capacity_bytes():
    try:
        return int(pltpu.get_tpu_info().vmem_capacity_bytes)
    except Exception:
        return 64 << 20  # conservative fallback (v7x per-TC VMEM)


def se_forward(x_nchw, params):
    """SELayer forward. x_nchw: (N, C, H, W) -> (N, C, H, W)."""
    N, C, H, W = x_nchw.shape
    w1 = params['w1']                    # (Cr, C)
    w2t = params['w2'].T                 # (Cr, C): C (>=64) on lanes
    Cr = w1.shape[0]
    HW = H * W
    HWp = max(128, pl.cdiv(HW, 128) * 128)   # lane-dense spatial axis

    # Free reshape; pad spatial lanes once up to a multiple of 128 so every
    # load/store is an unmasked full-width vld/vst even for HW = 49/196/3136.
    x2 = x_nchw.reshape(N, C, HW)
    if HWp != HW:
        x2 = jnp.pad(x2, ((0, 0), (0, 0), (0, HWp - HW)))
        ones_col = jnp.concatenate(
            [jnp.ones((HW, 1), x_nchw.dtype),
             jnp.zeros((HWp - HW, 1), x_nchw.dtype)], axis=0)
    else:
        ones_col = jnp.ones((HWp, 1), x_nchw.dtype)

    # Batch-tile selection from the VMEM budget: 4 streaming buffers
    # (in + out, double-buffered) of TB*C*HWp*itemsize each.
    itemsize = jnp.dtype(x_nchw.dtype).itemsize
    per_sample = C * HWp * itemsize
    vmem_cap = _vmem_capacity_bytes()
    budget = int(vmem_cap * 0.4)
    tb_max = max(1, budget // (4 * per_sample))
    TB = max(d for d in range(1, N + 1) if N % d == 0 and d <= tb_max)

    weights_bytes = (2 * Cr * C + HWp) * 4
    needed = 4 * TB * per_sample + 4 * weights_bytes + (2 << 20)
    vmem_limit = int(min(vmem_cap * 0.9, max(needed, 32 << 20)))

    kernel = functools.partial(_se_kernel, TB, C, HWp, 1.0 / HW)
    out = pl.pallas_call(
        kernel,
        out_shape=jax.ShapeDtypeStruct((N, C, HWp), x_nchw.dtype),
        grid_spec=pltpu.PrefetchScalarGridSpec(
            num_scalar_prefetch=0,
            grid=(N // TB,),
            in_specs=[
                pl.BlockSpec((TB, C, HWp), lambda n: (n, 0, 0)),
                pl.BlockSpec((HWp, 1), lambda n: (0, 0)),
                pl.BlockSpec((Cr, C), lambda n: (0, 0)),
                pl.BlockSpec((Cr, C), lambda n: (0, 0)),
            ],
            out_specs=pl.BlockSpec((TB, C, HWp), lambda n: (n, 0, 0)),
        ),
        compiler_params=pltpu.CompilerParams(
            dimension_semantics=("parallel",),
            vmem_limit_bytes=vmem_limit,
        ),
    )(x2, ones_col, w1, w2t)

    if HWp != HW:
        out = out[:, :, :HW]
    return out.reshape(N, C, H, W)


def se_reference(x, w1, w2):
    """Pure-JAX reference with identical semantics to the PyTorch module."""
    y = jnp.mean(x.astype(jnp.float32), axis=(2, 3))        # (B, C)
    h = jnp.maximum(y @ w1.T, 0.0)                           # (B, Cr)
    s = jax.nn.sigmoid(h @ w2.T)                             # (B, C)
    return (x * s[:, :, None, None].astype(x.dtype)).astype(x.dtype)


if __name__ == "__main__":
    key = jax.random.PRNGKey(0)
    kx, k1, k2, kx2 = jax.random.split(key, 4)

    # SELayer(channel=64, reduction=16) at a small spatial size.
    B, C, H, W = 4, 64, 16, 16
    REDUCTION = 16
    CR = C // REDUCTION

    x = jax.random.normal(kx, (B, C, H, W), jnp.float32)
    w1 = jax.random.normal(k1, (CR, C), jnp.float32) * (1.0 / np.sqrt(C))
    w2 = jax.random.normal(k2, (C, CR), jnp.float32) * (1.0 / np.sqrt(CR))
    params = dict(w1=w1, w2=w2)

    out = jax.block_until_ready(se_forward(x, params))
    assert out.shape == (B, C, H, W), out.shape
    ref = jax.block_until_ready(se_reference(x, w1, w2))
    np.testing.assert_allclose(np.asarray(out), np.asarray(ref),
                               rtol=1e-4, atol=1e-4)

    # Also exercise the lane-pad / masked-mean path (HW = 49, not 128-aligned).
    x7 = jax.random.normal(kx2, (2, C, 7, 7), jnp.float32)
    out7 = jax.block_until_ready(se_forward(x7, params))
    ref7 = jax.block_until_ready(se_reference(x7, w1, w2))
    np.testing.assert_allclose(np.asarray(out7), np.asarray(ref7),
                               rtol=1e-4, atol=1e-4)

    print("KERNEL_OK")
</pallas_src>

<mosaic_0001>
module attributes {stable_mosaic.version = 11 : i64} {
  func.func @_se_kernel(%arg0: i32, %arg1: memref<4x64x256xf32, #tpu.memory_space<vmem>>, %arg2: memref<256x1xf32, #tpu.memory_space<vmem>>, %arg3: memref<4x64xf32, #tpu.memory_space<vmem>>, %arg4: memref<4x64xf32, #tpu.memory_space<vmem>>, %arg5: memref<4x64x256xf32, #tpu.memory_space<vmem>>) attributes {dimension_semantics = [#tpu.dimension_semantics<parallel>], iteration_bounds = array<i64: 1>, scalar_prefetch = 0 : i64, scratch_operands = 0 : i64, tpu.core_type = #tpu.core_type<tc>, window_params = [{transform_indices = @transform_0, window_bounds = array<i64: 4, 64, 256>}, {pipeline_mode = #tpu.pipeline_mode<synchronous>, transform_indices = @transform_1, window_bounds = array<i64: 256, 1>}, {pipeline_mode = #tpu.pipeline_mode<synchronous>, transform_indices = @transform_2, window_bounds = array<i64: 4, 64>}, {pipeline_mode = #tpu.pipeline_mode<synchronous>, transform_indices = @transform_3, window_bounds = array<i64: 4, 64>}, {transform_indices = @transform_4, window_bounds = array<i64: 4, 64, 256>}]} {
    %c0 = arith.constant 0 : index
    %c0_0 = arith.constant 0 : index
    %c0_1 = arith.constant 0 : index
    %0 = vector.load %arg1[%c0, %c0_0, %c0_1] : memref<4x64x256xf32, #tpu.memory_space<vmem>>, vector<4x64x256xf32>
    %1 = vector.shape_cast %0 : vector<4x64x256xf32> to vector<256x256xf32>
    %c0_2 = arith.constant 0 : index
    %c0_3 = arith.constant 0 : index
    %2 = vector.load %arg2[%c0_2, %c0_3] : memref<256x1xf32, #tpu.memory_space<vmem>>, vector<256x1xf32>
    %cst = arith.constant dense<0.000000e+00> : vector<256x1xf32>
    %3 = tpu.matmul %1, %2, %cst {dimension_numbers = #tpu.dot_dimension_numbers<[1], [0], [0], [1], [0, 0, 1, 1], [], []>} : vector<256x256xf32>, vector<256x1xf32>, vector<256x1xf32> -> vector<256x1xf32>
    %4 = vector.shape_cast %3 : vector<256x1xf32> to vector<4x64xf32>
    %cst_4 = arith.constant 3.906250e-03 : f32
    %5 = vector.broadcast %cst_4 : f32 to vector<4x64xf32>
    %6 = arith.mulf %4, %5 : vector<4x64xf32>
    %c0_5 = arith.constant 0 : index
    %c0_6 = arith.constant 0 : index
    %7 = vector.load %arg3[%c0_5, %c0_6] : memref<4x64xf32, #tpu.memory_space<vmem>>, vector<4x64xf32>
    %cst_7 = arith.constant dense<0.000000e+00> : vector<4x4xf32>
    %8 = tpu.matmul %6, %7, %cst_7 {dimension_numbers = #tpu.dot_dimension_numbers<[1], [1], [0], [0], [0, 0, 1, 0], [], []>} : vector<4x64xf32>, vector<4x64xf32>, vector<4x4xf32> -> vector<4x4xf32>
    %cst_8 = arith.constant 0.000000e+00 : f32
    %9 = vector.broadcast %cst_8 : f32 to vector<4x4xf32>
    %10 = arith.maximumf %8, %9 : vector<4x4xf32>
    %c0_9 = arith.constant 0 : index
    %c0_10 = arith.constant 0 : index
    %11 = vector.load %arg4[%c0_9, %c0_10] : memref<4x64xf32, #tpu.memory_space<vmem>>, vector<4x64xf32>
    %cst_11 = arith.constant dense<0.000000e+00> : vector<4x64xf32>
    %12 = tpu.matmul %10, %11, %cst_11 {dimension_numbers = #tpu.dot_dimension_numbers<[1], [0], [0], [1], [0, 0, 1, 1], [], []>} : vector<4x4xf32>, vector<4x64xf32>, vector<4x64xf32> -> vector<4x64xf32>
    %13 = arith.negf %12 : vector<4x64xf32>
    %14 = math.exp %13 : vector<4x64xf32>
    %cst_12 = arith.constant 1.000000e+00 : f32
    %15 = vector.broadcast %cst_12 : f32 to vector<4x64xf32>
    %16 = arith.addf %15, %14 : vector<4x64xf32>
    %17 = arith.divf %15, %16 : vector<4x64xf32>
    %c0_13 = arith.constant 0 : index
    %c0_14 = arith.constant 0 : index
    %c0_15 = arith.constant 0 : index
    %18 = vector.load %arg1[%c0_13, %c0_14, %c0_15] : memref<4x64x256xf32, #tpu.memory_space<vmem>>, vector<4x64x256xf32>
    %19 = vector.shape_cast %17 : vector<4x64xf32> to vector<4x64x1xf32>
    %20 = vector.broadcast %19 : vector<4x64x1xf32> to vector<4x64x256xf32>
    %21 = arith.mulf %18, %20 : vector<4x64x256xf32>
    %c0_16 = arith.constant 0 : index
    %c0_17 = arith.constant 0 : index
    %c0_18 = arith.constant 0 : index
    %22 = vector.load %arg5[%c0_16, %c0_17, %c0_18] : memref<4x64x256xf32, #tpu.memory_space<vmem>>, vector<4x64x256xf32>
    tpu.vector_store %arg5[%c0_16, %c0_17, %c0_18], %21 {strides = array<i32>} : memref<4x64x256xf32, #tpu.memory_space<vmem>>, vector<4x64x256xf32>,
    return
  }
  func.func @transform_0(%arg0: i32) -> (i32, i32, i32) {
    %c0_i32 = arith.constant 0 : i32
    %c0_i32_0 = arith.constant 0 : i32
    %c0_i32_1 = arith.constant 0 : i32
    return %arg0, %c0_i32, %c0_i32_0 : i32, i32, i32
  }
  func.func @transform_1(%arg0: i32) -> (i32, i32) {
    %c0_i32 = arith.constant 0 : i32
    %c0_i32_0 = arith.constant 0 : i32
    %c0_i32_1 = arith.constant 0 : i32
    return %c0_i32, %c0_i32_0 : i32, i32
  }
  func.func @transform_2(%arg0: i32) -> (i32, i32) {
    %c0_i32 = arith.constant 0 : i32
    %c0_i32_0 = arith.constant 0 : i32
    %c0_i32_1 = arith.constant 0 : i32
    return %c0_i32, %c0_i32_0 : i32, i32
  }
  func.func @transform_3(%arg0: i32) -> (i32, i32) {
    %c0_i32 = arith.constant 0 : i32
    %c0_i32_0 = arith.constant 0 : i32
    %c0_i32_1 = arith.constant 0 : i32
    return %c0_i32, %c0_i32_0 : i32, i32
  }
  func.func @transform_4(%arg0: i32) -> (i32, i32, i32) {
    %c0_i32 = arith.constant 0 : i32
    %c0_i32_0 = arith.constant 0 : i32
    %c0_i32_1 = arith.constant 0 : i32
    return %arg0, %c0_i32, %c0_i32_0 : i32, i32, i32
  }
}

</mosaic_0001>

<llo_original>
// kernel: tpu_custom_call.1
$region0: #{tpu_custom_call.1}
  #allocation0 [shape = 'u32[]', space=smem, size = 0x4, offset = 0x4, fixed_abs, tag = 'smem constant byte address 0x4 - core index']
  #allocation1 [shape = 'u32[144,128]{1,0:T(1,128)}', space=vmem, size = 0x12000, scoped, tag = 'internal scratch']
  %s0 = inlined_call_operand.hbm [shape: f32[4,64,256], index: 0, kind: input, shape index: {}]
  %s1 = inlined_call_operand.vmem [shape: f32[256,1], index: 1, kind: input, shape index: {}]
  %s2 = inlined_call_operand.vmem [shape: f32[4,64], index: 2, kind: input, shape index: {}]
  %s3 = inlined_call_operand.vmem [shape: f32[4,64], index: 3, kind: input, shape index: {}]
  %s4 = inlined_call_operand.hbm [shape: f32[4,64,256], index: 4, kind: output, shape index: {}]
  %s5 = sld [smem:[#allocation0]]
  $region30: #{tpu_custom_call.1} parent=0
    _
  %s7 = ssub.s32 1, %s5
  %s8 = scalar_select 0, %s7, %s5
  $region1: #{tpu_custom_call.1} parent=0
    #allocation2 [shape = 'u8[262144]{0}', space=vmem, size = 0x40000, scoped, tag = 'input window, operand 0, single buffered']
    #allocation3 [shape = 's32[1]{0}', space=sflag, size = 0x4, scoped, tag = 'scoped memory for tpu_custom_call.1']
    #allocation4 [shape = 's32[1]{0}', space=sflag, size = 0x4, scoped, tag = 'scoped memory for tpu_custom_call.1']
    #allocation5 [shape = 'u8[262144]{0}', space=vmem, size = 0x40000, scoped, tag = 'output window, operand 0, single buffered']
    %9 = vsyncpa [#allocation3], 0
    %10 = vsyncpa [#allocation4], 0
    // Predicated region
    $region2: #{tpu_custom_call.1} parent=1 // pred_check
      _
    $region3: #{tpu_custom_call.1} parent=1 // pred_check_branch
      %12 = sbr.rel (0) target = $region5
    $region4: #{tpu_custom_call.1} parent=1 // pred_region
      %s14 = ssub.s32 8192, 8192
      %15 = vsyncadd [#allocation3], %s14
      %s16 = sshll.u32 [#allocation2], 4
      %s17 = int_to_ptr.vmem [resolvable:$true] %s16
      %22 = dma.hbm_to_vmem [thread:$0]  %s0, 8192, %s17, [#allocation3], 256, 256, 16
    $region5: #{tpu_custom_call.1} parent=1 // pred_fallthru
      _
    // Predicated region
    $region6: #{tpu_custom_call.1} parent=1 // pred_check
      _
    $region7: #{tpu_custom_call.1} parent=1 // pred_check_branch
      %24 = sbr.rel (0) target = $region9
    $region8: #{tpu_custom_call.1} parent=1 // pred_region
      _
    $region9: #{tpu_custom_call.1} parent=1 // pred_fallthru
      _
    // Predicated region
    $region10: #{tpu_custom_call.1} parent=1 // pred_check
      _
    $region11: #{tpu_custom_call.1} parent=1 // pred_check_branch
      %26 = sbr.rel (0) target = $region13
    $region12: #{tpu_custom_call.1} parent=1 // pred_region
      _
    $region13: #{tpu_custom_call.1} parent=1 // pred_fallthru
      _
    // Predicated region
    $region14: #{tpu_custom_call.1} parent=1 // pred_check
      _
    $region15: #{tpu_custom_call.1} parent=1 // pred_check_branch
      %28 = sbr.rel (0) target = $region17
    $region16: #{tpu_custom_call.1} parent=1 // pred_region
      _
    $region17: #{tpu_custom_call.1} parent=1 // pred_fallthru
      _
    // Predicated region
    $region18: #{tpu_custom_call.1} parent=1 // pred_check
      _
    $region19: #{tpu_custom_call.1} parent=1 // pred_check_branch
      %30 = sbr.rel (0) target = $region21
    $region20: #{tpu_custom_call.1} parent=1 // pred_region
      %31 = dma.done [#allocation3], 8192
    $region21: #{tpu_custom_call.1} parent=1 // pred_fallthru
      _
    %v32 = vld [vmem:[#allocation2] sm:$0xff]
    %v33 = vld [vmem:[#allocation2 + $0x8] sm:$0xff]
    %v34 = vld [vmem:[#allocation2 + $0x10] sm:$0xff]
    %v35 = vld [vmem:[#allocation2 + $0x18] sm:$0xff]
    %v36 = vld [vmem:[#allocation2 + $0x20] sm:$0xff]
    %v37 = vld [vmem:[#allocation2 + $0x28] sm:$0xff]
    %v38 = vld [vmem:[#allocation2 + $0x30] sm:$0xff]
    %v39 = vld [vmem:[#allocation2 + $0x38] sm:$0xff]
    %v40 = vld [vmem:[#allocation2 + $0x40] sm:$0xff]
    %v41 = vld [vmem:[#allocation2 + $0x48] sm:$0xff]
    %v42 = vld [vmem:[#allocation2 + $0x50] sm:$0xff]
    %v43 = vld [vmem:[#allocation2 + $0x58] sm:$0xff]
    %v44 = vld [vmem:[#allocation2 + $0x60] sm:$0xff]
    %v45 = vld [vmem:[#allocation2 + $0x68] sm:$0xff]
    %v46 = vld [vmem:[#allocation2 + $0x70] sm:$0xff]
    %v47 = vld [vmem:[#allocation2 + $0x78] sm:$0xff]
    %v48 = vld [vmem:[#allocation2 + $0x80] sm:$0xff]
    %v49 = vld [vmem:[#allocation2 + $0x88] sm:$0xff]
    %v50 = vld [vmem:[#allocation2 + $0x90] sm:$0xff]
    %v51 = vld [vmem:[#allocation2 + $0x98] sm:$0xff]
    %v52 = vld [vmem:[#allocation2 + $0xa0] sm:$0xff]
    %v53 = vld [vmem:[#allocation2 + $0xa8] sm:$0xff]
    %v54 = vld [vmem:[#allocation2 + $0xb0] sm:$0xff]
    %v55 = vld [vmem:[#allocation2 + $0xb8] sm:$0xff]
    %v56 = vld [vmem:[#allocation2 + $0xc0] sm:$0xff]
    %v57 = vld [vmem:[#allocation2 + $0xc8] sm:$0xff]
    %v58 = vld [vmem:[#allocation2 + $0xd0] sm:$0xff]
    %v59 = vld [vmem:[#allocation2 + $0xd8] sm:$0xff]
    %v60 = vld [vmem:[#allocation2 + $0xe0] sm:$0xff]
    %v61 = vld [vmem:[#allocation2 + $0xe8] sm:$0xff]
    %v62 = vld [vmem:[#allocation2 + $0xf0] sm:$0xff]
    %v63 = vld [vmem:[#allocation2 + $0xf8] sm:$0xff]
    %v64 = vld [vmem:[#allocation2 + $0x100] sm:$0xff]
    %v65 = vld [vmem:[#allocation2 + $0x108] sm:$0xff]
    %v66 = vld [vmem:[#allocation2 + $0x110] sm:$0xff]
    %v67 = vld [vmem:[#allocation2 + $0x118] sm:$0xff]
    %v68 = vld [vmem:[#allocation2 + $0x120] sm:$0xff]
    %v69 = vld [vmem:[#allocation2 + $0x128] sm:$0xff]
    %v70 = vld [vmem:[#allocation2 + $0x130] sm:$0xff]
    %v71 = vld [vmem:[#allocation2 + $0x138] sm:$0xff]
    %v72 = vld [vmem:[#allocation2 + $0x140] sm:$0xff]
    %v73 = vld [vmem:[#allocation2 + $0x148] sm:$0xff]
    %v74 = vld [vmem:[#allocation2 + $0x150] sm:$0xff]
    %v75 = vld [vmem:[#allocation2 + $0x158] sm:$0xff]
    %v76 = vld [vmem:[#allocation2 + $0x160] sm:$0xff]
    %v77 = vld [vmem:[#allocation2 + $0x168] sm:$0xff]
    %v78 = vld [vmem:[#allocation2 + $0x170] sm:$0xff]
    %v79 = vld [vmem:[#allocation2 + $0x178] sm:$0xff]
    %v80 = vld [vmem:[#allocation2 + $0x180] sm:$0xff]
    %v81 = vld [vmem:[#allocation2 + $0x188] sm:$0xff]
    %v82 = vld [vmem:[#allocation2 + $0x190] sm:$0xff]
    %v83 = vld [vmem:[#allocation2 + $0x198] sm:$0xff]
    %v84 = vld [vmem:[#allocation2 + $0x1a0] sm:$0xff]
    %v85 = vld [vmem:[#allocation2 + $0x1a8] sm:$0xff]
    %v86 = vld [vmem:[#allocation2 + $0x1b0] sm:$0xff]
    %v87 = vld [vmem:[#allocation2 + $0x1b8] sm:$0xff]
    %v88 = vld [vmem:[#allocation2 + $0x1c0] sm:$0xff]
    %v89 = vld [vmem:[#allocation2 + $0x1c8] sm:$0xff]
    %v90 = vld [vmem:[#allocation2 + $0x1d0] sm:$0xff]
    %v91 = vld [vmem:[#allocation2 + $0x1d8] sm:$0xff]
    %v92 = vld [vmem:[#allocation2 + $0x1e0] sm:$0xff]
    %v93 = vld [vmem:[#allocation2 + $0x1e8] sm:$0xff]
    %v94 = vld [vmem:[#allocation2 + $0x1f0] sm:$0xff]
    %v95 = vld [vmem:[#allocation2 + $0x1f8] sm:$0xff]
    %v96 = vld [vmem:[%s1] sm:$0xff]
    %v97 = vld [vmem:[%s1 + $0x8] sm:$0xff]
    %v98 = vld [vmem:[%s1 + $0x10] sm:$0xff]
    %v99 = vld [vmem:[%s1 + $0x18] sm:$0xff]
    %v100 = vld [vmem:[%s1 + $0x20] sm:$0xff]
    %v101 = vld [vmem:[%s1 + $0x28] sm:$0xff]
    %v102 = vld [vmem:[%s1 + $0x30] sm:$0xff]
    %v103 = vld [vmem:[%s1 + $0x38] sm:$0xff]
    %v104 = vld [vmem:[%s1 + $0x40] sm:$0xff]
    %v105 = vld [vmem:[%s1 + $0x48] sm:$0xff]
    %v106 = vld [vmem:[%s1 + $0x50] sm:$0xff]
    %v107 = vld [vmem:[%s1 + $0x58] sm:$0xff]
    %v108 = vld [vmem:[%s1 + $0x60] sm:$0xff]
    %v109 = vld [vmem:[%s1 + $0x68] sm:$0xff]
    %v110 = vld [vmem:[%s1 + $0x70] sm:$0xff]
    %v111 = vld [vmem:[%s1 + $0x78] sm:$0xff]
    %v112 = vld [vmem:[%s1 + $0x80] sm:$0xff]
    %v113 = vld [vmem:[%s1 + $0x88] sm:$0xff]
    %v114 = vld [vmem:[%s1 + $0x90] sm:$0xff]
    %v115 = vld [vmem:[%s1 + $0x98] sm:$0xff]
    %v116 = vld [vmem:[%s1 + $0xa0] sm:$0xff]
    %v117 = vld [vmem:[%s1 + $0xa8] sm:$0xff]
    %v118 = vld [vmem:[%s1 + $0xb0] sm:$0xff]
    %v119 = vld [vmem:[%s1 + $0xb8] sm:$0xff]
    %v120 = vld [vmem:[%s1 + $0xc0] sm:$0xff]
    %v121 = vld [vmem:[%s1 + $0xc8] sm:$0xff]
    %v122 = vld [vmem:[%s1 + $0xd0] sm:$0xff]
    %v123 = vld [vmem:[%s1 + $0xd8] sm:$0xff]
    %v124 = vld [vmem:[%s1 + $0xe0] sm:$0xff]
    %v125 = vld [vmem:[%s1 + $0xe8] sm:$0xff]
    %v126 = vld [vmem:[%s1 + $0xf0] sm:$0xff]
    %v127 = vld [vmem:[%s1 + $0xf8] sm:$0xff]
    %128 = vmatprep.subr.mxu0 0.0
    %129 = vmatpush1.msra.mxu0 %v96
    %130 = vmatprep.subr.mxu0 0.0
    %131 = vmatpush1.msra.mxu0 %v97
    %132 = vmatprep.subr.mxu0 0.0
    %133 = vmatpush1.msra.mxu0 %v98
    %134 = vmatprep.subr.mxu0 0.0
    %135 = vmatpush1.msra.mxu0 %v99
    %136 = vmatprep.subr.mxu0 0.0
    %137 = vmatpush1.msra.mxu0 %v100
    %138 = vmatprep.subr.mxu0 0.0
    %139 = vmatpush1.msra.mxu0 %v101
    %140 = vmatprep.subr.mxu0 0.0
    %141 = vmatpush1.msra.mxu0 %v102
    %142 = vmatprep.subr.mxu0 0.0
    %143 = vmatpush1.msra.mxu0 %v103
    %144 = vmatprep.subr.mxu0 0.0
    %145 = vmatpush1.msra.mxu0 %v104
    %146 = vmatprep.subr.mxu0 0.0
    %147 = vmatpush1.msra.mxu0 %v105
    %148 = vmatprep.subr.mxu0 0.0
    %149 = vmatpush1.msra.mxu0 %v106
    %150 = vmatprep.subr.mxu0 0.0
    %151 = vmatpush1.msra.mxu0 %v107
    %152 = vmatprep.subr.mxu0 0.0
    %153 = vmatpush1.msra.mxu0 %v108
    %154 = vmatprep.subr.mxu0 0.0
    %155 = vmatpush1.msra.mxu0 %v109
    %156 = vmatprep.subr.mxu0 0.0
    %157 = vmatpush1.msra.mxu0 %v110
    %158 = vmatprep.subr.mxu0 0.0
    %159 = vmatpush1.msra.mxu0 %v111
    %160 = vmatprep.subr.mxu0 0.0
    %161 = vmatpush1.msra.mxu0 %v112
    %162 = vmatprep.subr.mxu0 0.0
    %163 = vmatpush1.msra.mxu0 %v113
    %164 = vmatprep.subr.mxu0 0.0
    %165 = vmatpush1.msra.mxu0 %v114
    %166 = vmatprep.subr.mxu0 0.0
    %167 = vmatpush1.msra.mxu0 %v115
    %168 = vmatprep.subr.mxu0 0.0
    %169 = vmatpush1.msra.mxu0 %v116
    %170 = vmatprep.subr.mxu0 0.0
    %171 = vmatpush1.msra.mxu0 %v117
    %172 = vmatprep.subr.mxu0 0.0
    %173 = vmatpush1.msra.mxu0 %v118
    %174 = vmatprep.subr.mxu0 0.0
    %175 = vmatpush1.msra.mxu0 %v119
    %176 = vmatprep.subr.mxu0 0.0
    %177 = vmatpush1.msra.mxu0 %v120
    %178 = vmatprep.subr.mxu0 0.0
    %179 = vmatpush1.msra.mxu0 %v121
    %180 = vmatprep.subr.mxu0 0.0
    %181 = vmatpush1.msra.mxu0 %v122
    %182 = vmatprep.subr.mxu0 0.0
    %183 = vmatpush1.msra.mxu0 %v123
    %184 = vmatprep.subr.mxu0 0.0
    %185 = vmatpush1.msra.mxu0 %v124
    %186 = vmatprep.subr.mxu0 0.0
    %187 = vmatpush1.msra.mxu0 %v125
    %188 = vmatprep.subr.mxu0 0.0
    %189 = vmatpush1.msra.mxu0 %v126
    %190 = vmatprep.subr.mxu0 0.0
    %191 = vmatpush1.msra.mxu0 %v127
    %192 = vmatprep.mubr.f32.mxu0 %v33
    %193 = vmatmul.mubr.f32.gmra.mrb[0].mxu0 %v32
    %v194 = vpop.f32.mrb[0].mxu0
    %v195 = vadd.f32 0.0, %v194
    %v196 = vpop.f32.mrb[0].mxu0
    %197 = vmatprep.mubr.f32.mxu0 %v35
    %198 = vmatmul.mubr.f32.gmra.mrb[0].mxu0 %v34
    %v199 = vpop.f32.mrb[0].mxu0
    %v200 = vadd.f32 0.0, %v199
    %v201 = vpop.f32.mrb[0].mxu0
    %202 = vmatprep.mubr.f32.mxu0 %v37
    %203 = vmatmul.mubr.f32.gmra.mrb[0].mxu0 %v36
    %v204 = vpop.f32.mrb[0].mxu0
    %v205 = vadd.f32 0.0, %v204
    %v206 = vpop.f32.mrb[0].mxu0
    %207 = vmatprep.mubr.f32.mxu0 %v39
    %208 = vmatmul.mubr.f32.gmra.mrb[0].mxu0 %v38
    %v209 = vpop.f32.mrb[0].mxu0
    %v210 = vadd.f32 0.0, %v209
    %v211 = vpop.f32.mrb[0].mxu0
    %212 = vmatprep.mubr.f32.mxu0 %v41
    %213 = vmatmul.mubr.f32.gmra.mrb[0].mxu0 %v40
    %v214 = vpop.f32.mrb[0].mxu0
    %v215 = vadd.f32 0.0, %v214
    %v216 = vpop.f32.mrb[0].mxu0
    %217 = vmatprep.mubr.f32.mxu0 %v43
    %218 = vmatmul.mubr.f32.gmra.mrb[0].mxu0 %v42
    %v219 = vpop.f32.mrb[0].mxu0
    %v220 = vadd.f32 0.0, %v219
    %v221 = vpop.f32.mrb[0].mxu0
    %222 = vmatprep.mubr.f32.mxu0 %v45
    %223 = vmatmul.mubr.f32.gmra.mrb[0].mxu0 %v44
    %v224 = vpop.f32.mrb[0].mxu0
    %v225 = vadd.f32 0.0, %v224
    %v226 = vpop.f32.mrb[0].mxu0
    %227 = vmatprep.mubr.f32.mxu0 %v47
    %228 = vmatmul.mubr.f32.gmra.mrb[0].mxu0 %v46
    %v229 = vpop.f32.mrb[0].mxu0
    %v230 = vadd.f32 0.0, %v229
    %v231 = vpop.f32.mrb[0].mxu0
    %232 = vmatprep.mubr.f32.mxu0 %v49
    %233 = vmatmul.mubr.f32.gmra.mrb[0].mxu0 %v48
    %v234 = vpop.f32.mrb[0].mxu0
    %v235 = vadd.f32 0.0, %v234
    %v236 = vpop.f32.mrb[0].mxu0
    %237 = vmatprep.mubr.f32.mxu0 %v51
    %238 = vmatmul.mubr.f32.gmra.mrb[0].mxu0 %v50
    %v239 = vpop.f32.mrb[0].mxu0
    %v240 = vadd.f32 0.0, %v239
    %v241 = vpop.f32.mrb[0].mxu0
    %242 = vmatprep.mubr.f32.mxu0 %v53
    %243 = vmatmul.mubr.f32.gmra.mrb[0].mxu0 %v52
    %v244 = vpop.f32.mrb[0].mxu0
    %v245 = vadd.f32 0.0, %v244
    %v246 = vpop.f32.mrb[0].mxu0
    %247 = vmatprep.mubr.f32.mxu0 %v55
    %248 = vmatmul.mubr.f32.gmra.mrb[0].mxu0 %v54
    %v249 = vpop.f32.mrb[0].mxu0
    %v250 = vadd.f32 0.0, %v249
    %v251 = vpop.f32.mrb[0].mxu0
    %252 = vmatprep.mubr.f32.mxu0 %v57
    %253 = vmatmul.mubr.f32.gmra.mrb[0].mxu0 %v56
    %v254 = vpop.f32.mrb[0].mxu0
    %v255 = vadd.f32 0.0, %v254
    %v256 = vpop.f32.mrb[0].mxu0
    %257 = vmatprep.mubr.f32.mxu0 %v59
    %258 = vmatmul.mubr.f32.gmra.mrb[0].mxu0 %v58
    %v259 = vpop.f32.mrb[0].mxu0
    %v260 = vadd.f32 0.0, %v259
    %v261 = vpop.f32.mrb[0].mxu0
    %262 = vmatprep.mubr.f32.mxu0 %v61
    %263 = vmatmul.mubr.f32.gmra.mrb[0].mxu0 %v60
    %v264 = vpop.f32.mrb[0].mxu0
    %v265 = vadd.f32 0.0, %v264
    %v266 = vpop.f32.mrb[0].mxu0
    %267 = vmatprep.mubr.f32.mxu0 %v63
    %268 = vmatmul.mubr.f32.gmra.mrb[0].mxu0 %v62
    %v269 = vpop.f32.mrb[0].mxu0
    %v270 = vadd.f32 0.0, %v269
    %v271 = vpop.f32.mrb[0].mxu0
    %272 = vmatprep.mubr.f32.mxu0 %v65
    %273 = vmatmul.mubr.f32.gmra.mrb[0].mxu0 %v64
    %v274 = vpop.f32.mrb[0].mxu0
    %v275 = vadd.f32 0.0, %v274
    %v276 = vpop.f32.mrb[0].mxu0
    %277 = vmatprep.mubr.f32.mxu0 %v67
    %278 = vmatmul.mubr.f32.gmra.mrb[0].mxu0 %v66
    %v279 = vpop.f32.mrb[0].mxu0
    %v280 = vadd.f32 0.0, %v279
    %v281 = vpop.f32.mrb[0].mxu0
    %282 = vmatprep.mubr.f32.mxu0 %v69
    %283 = vmatmul.mubr.f32.gmra.mrb[0].mxu0 %v68
    %v284 = vpop.f32.mrb[0].mxu0
    %v285 = vadd.f32 0.0, %v284
    %v286 = vpop.f32.mrb[0].mxu0
    %287 = vmatprep.mubr.f32.mxu0 %v71
    %288 = vmatmul.mubr.f32.gmra.mrb[0].mxu0 %v70
    %v289 = vpop.f32.mrb[0].mxu0
    %v290 = vadd.f32 0.0, %v289
    %v291 = vpop.f32.mrb[0].mxu0
    %292 = vmatprep.mubr.f32.mxu0 %v73
    %293 = vmatmul.mubr.f32.gmra.mrb[0].mxu0 %v72
    %v294 = vpop.f32.mrb[0].mxu0
    %v295 = vadd.f32 0.0, %v294
    %v296 = vpop.f32.mrb[0].mxu0
    %297 = vmatprep.mubr.f32.mxu0 %v75
    %298 = vmatmul.mubr.f32.gmra.mrb[0].mxu0 %v74
    %v299 = vpop.f32.mrb[0].mxu0
    %v300 = vadd.f32 0.0, %v299
    %v301 = vpop.f32.mrb[0].mxu0
    %302 = vmatprep.mubr.f32.mxu0 %v77
    %303 = vmatmul.mubr.f32.gmra.mrb[0].mxu0 %v76
    %v304 = vpop.f32.mrb[0].mxu0
    %v305 = vadd.f32 0.0, %v304
    %v306 = vpop.f32.mrb[0].mxu0
    %307 = vmatprep.mubr.f32.mxu0 %v79
    %308 = vmatmul.mubr.f32.gmra.mrb[0].mxu0 %v78
    %v309 = vpop.f32.mrb[0].mxu0
    %v310 = vadd.f32 0.0, %v309
    %v311 = vpop.f32.mrb[0].mxu0
    %312 = vmatprep.mubr.f32.mxu0 %v81
    %313 = vmatmul.mubr.f32.gmra.mrb[0].mxu0 %v80
    %v314 = vpop.f32.mrb[0].mxu0
    %v315 = vadd.f32 0.0, %v314
    %v316 = vpop.f32.mrb[0].mxu0
    %317 = vmatprep.mubr.f32.mxu0 %v83
    %318 = vmatmul.mubr.f32.gmra.mrb[0].mxu0 %v82
    %v319 = vpop.f32.mrb[0].mxu0
    %v320 = vadd.f32 0.0, %v319
    %v321 = vpop.f32.mrb[0].mxu0
    %322 = vmatprep.mubr.f32.mxu0 %v85
    %323 = vmatmul.mubr.f32.gmra.mrb[0].mxu0 %v84
    %v324 = vpop.f32.mrb[0].mxu0
    %v325 = vadd.f32 0.0, %v324
    %v326 = vpop.f32.mrb[0].mxu0
    %327 = vmatprep.mubr.f32.mxu0 %v87
    %328 = vmatmul.mubr.f32.gmra.mrb[0].mxu0 %v86
    %v329 = vpop.f32.mrb[0].mxu0
    %v330 = vadd.f32 0.0, %v329
    %v331 = vpop.f32.mrb[0].mxu0
    %332 = vmatprep.mubr.f32.mxu0 %v89
    %333 = vmatmul.mubr.f32.gmra.mrb[0].mxu0 %v88
    %v334 = vpop.f32.mrb[0].mxu0
    %v335 = vadd.f32 0.0, %v334
    %v336 = vpop.f32.mrb[0].mxu0
    %337 = vmatprep.mubr.f32.mxu0 %v91
    %338 = vmatmul.mubr.f32.gmra.mrb[0].mxu0 %v90
    %v339 = vpop.f32.mrb[0].mxu0
    %v340 = vadd.f32 0.0, %v339
    %v341 = vpop.f32.mrb[0].mxu0
    %342 = vmatprep.mubr.f32.mxu0 %v93
    %343 = vmatmul.mubr.f32.gmra.mrb[0].mxu0 %v92
    %v344 = vpop.f32.mrb[0].mxu0
    %v345 = vadd.f32 0.0, %v344
    %v346 = vpop.f32.mrb[0].mxu0
    %347 = vmatprep.mubr.f32.mxu0 %v95
    %348 = vmatmul.mubr.f32.gmra.mrb[0].mxu0 %v94
    %v349 = vpop.f32.mrb[0].mxu0
    %v350 = vadd.f32 0.0, %v349
    %v351 = vpop.f32.mrb[0].mxu0
    %352 = vdwg.mxu0
    %v353 = vmul.f32 %v195, 0.00390625
    %v354 = vmul.f32 %v200, 0.00390625
    %v355 = vmul.f32 %v205, 0.00390625
    %v356 = vmul.f32 %v210, 0.00390625
    %v357 = vmul.f32 %v215, 0.00390625
    %v358 = vmul.f32 %v220, 0.00390625
    %v359 = vmul.f32 %v225, 0.00390625
    %v360 = vmul.f32 %v230, 0.00390625
    %v361 = vmul.f32 %v235, 0.00390625
    %v362 = vmul.f32 %v240, 0.00390625
    %v363 = vmul.f32 %v245, 0.00390625
    %v364 = vmul.f32 %v250, 0.00390625
    %v365 = vmul.f32 %v255, 0.00390625
    %v366 = vmul.f32 %v260, 0.00390625
    %v367 = vmul.f32 %v265, 0.00390625
    %v368 = vmul.f32 %v270, 0.00390625
    %v369 = vmul.f32 %v275, 0.00390625
    %v370 = vmul.f32 %v280, 0.00390625
    %v371 = vmul.f32 %v285, 0.00390625
    %v372 = vmul.f32 %v290, 0.00390625
    %v373 = vmul.f32 %v295, 0.00390625
    %v374 = vmul.f32 %v300, 0.00390625
    %v375 = vmul.f32 %v305, 0.00390625
    %v376 = vmul.f32 %v310, 0.00390625
    %v377 = vmul.f32 %v315, 0.00390625
    %v378 = vmul.f32 %v320, 0.00390625
    %v379 = vmul.f32 %v325, 0.00390625
    %v380 = vmul.f32 %v330, 0.00390625
    %v381 = vmul.f32 %v335, 0.00390625
    %v382 = vmul.f32 %v340, 0.00390625
    %v383 = vmul.f32 %v345, 0.00390625
    %v384 = vmul.f32 %v350, 0.00390625
    %v385 = vld [vmem:[%s2] sm:$0xf]
    %418 = vset.pattern.permute.xlu0 0
    %419 = vperm.xlu0 %418, %v353
    %v420 = vpop.permute.xlu0 %419
    %421 = vset.pattern.permute.xlu0 0
    %422 = vperm.xlu0 %421, %v354
    %v423 = vpop.permute.xlu0 %422
    %424 = vset.pattern.permute.xlu0 0
    %425 = vperm.xlu0 %424, %v355
    %v426 = vpop.permute.xlu0 %425
    %427 = vset.pattern.permute.xlu0 0
    %428 = vperm.xlu0 %427, %v356
    %v429 = vpop.permute.xlu0 %428
    %430 = vset.pattern.permute.xlu0 0
    %431 = vperm.xlu0 %430, %v357
    %v432 = vpop.permute.xlu0 %431
    %433 = vset.pattern.permute.xlu0 0
    %434 = vperm.xlu0 %433, %v358
    %v435 = vpop.permute.xlu0 %434
    %436 = vset.pattern.permute.xlu0 0
    %437 = vperm.xlu0 %436, %v359
    %v438 = vpop.permute.xlu0 %437
    %439 = vset.pattern.permute.xlu0 0
    %440 = vperm.xlu0 %439, %v360
    %v441 = vpop.permute.xlu0 %440
    %442 = vset.pattern.permute.xlu0 0
    %443 = vperm.xlu0 %442, %v361
    %v444 = vpop.permute.xlu0 %443
    %445 = vset.pattern.permute.xlu0 0
    %446 = vperm.xlu0 %445, %v362
    %v447 = vpop.permute.xlu0 %446
    %448 = vset.pattern.permute.xlu0 0
    %449 = vperm.xlu0 %448, %v363
    %v450 = vpop.permute.xlu0 %449
    %451 = vset.pattern.permute.xlu0 0
    %452 = vperm.xlu0 %451, %v364
    %v453 = vpop.permute.xlu0 %452
    %454 = vset.pattern.permute.xlu0 0
    %455 = vperm.xlu0 %454, %v365
    %v456 = vpop.permute.xlu0 %455
    %457 = vset.pattern.permute.xlu0 0
    %458 = vperm.xlu0 %457, %v366
    %v459 = vpop.permute.xlu0 %458
    %460 = vset.pattern.permute.xlu0 0
    %461 = vperm.xlu0 %460, %v367
    %v462 = vpop.permute.xlu0 %461
    %463 = vset.pattern.permute.xlu0 0
    %464 = vperm.xlu0 %463, %v368
    %v465 = vpop.permute.xlu0 %464
    %466 = vset.pattern.permute.xlu0 0
    %467 = vperm.xlu0 %466, %v369
    %v468 = vpop.permute.xlu0 %467
    %469 = vset.pattern.permute.xlu0 0
    %470 = vperm.xlu0 %469, %v370
    %v471 = vpop.permute.xlu0 %470
    %472 = vset.pattern.permute.xlu0 0
    %473 = vperm.xlu0 %472, %v371
    %v474 = vpop.permute.xlu0 %473
    %475 = vset.pattern.permute.xlu0 0
    %476 = vperm.xlu0 %475, %v372
    %v477 = vpop.permute.xlu0 %476
    %478 = vset.pattern.permute.xlu0 0
    %479 = vperm.xlu0 %478, %v373
    %v480 = vpop.permute.xlu0 %479
    %481 = vset.pattern.permute.xlu0 0
    %482 = vperm.xlu0 %481, %v374
    %v483 = vpop.permute.xlu0 %482
    %484 = vset.pattern.permute.xlu0 0
    %485 = vperm.xlu0 %484, %v375
    %v486 = vpop.permute.xlu0 %485
    %487 = vset.pattern.permute.xlu0 0
    %488 = vperm.xlu0 %487, %v376
    %v489 = vpop.permute.xlu0 %488
    %490 = vset.pattern.permute.xlu0 0
    %491 = vperm.xlu0 %490, %v377
    %v492 = vpop.permute.xlu0 %491
    %493 = vset.pattern.permute.xlu0 0
    %494 = vperm.xlu0 %493, %v378
    %v495 = vpop.permute.xlu0 %494
    %496 = vset.pattern.permute.xlu0 0
    %497 = vperm.xlu0 %496, %v379
    %v498 = vpop.permute.xlu0 %497
    %499 = vset.pattern.permute.xlu0 0
    %500 = vperm.xlu0 %499, %v380
    %v501 = vpop.permute.xlu0 %500
    %502 = vset.pattern.permute.xlu0 0
    %503 = vperm.xlu0 %502, %v381
    %v504 = vpop.permute.xlu0 %503
    %505 = vset.pattern.permute.xlu0 0
    %506 = vperm.xlu0 %505, %v382
    %v507 = vpop.permute.xlu0 %506
    %508 = vset.pattern.permute.xlu0 0
    %509 = vperm.xlu0 %508, %v383
    %v510 = vpop.permute.xlu0 %509
    %511 = vset.pattern.permute.xlu0 0
    %512 = vperm.xlu0 %511, %v384
    %v513 = vpop.permute.xlu0 %512
    %v514 = vlaneseq
    %v515 = vand.u32 %v514, 127
    %v516 = vlaneseq
    %v517 = vshrl.u32 %v516, 7
    %v518 = vsub.s32 %v515, %v517
    %v519 = vrot.slane %v420, %v518
    %v520 = vadd.s32 %v515, 4294967288
    %v521 = vlaneseq
    %v522 = vshrl.u32 %v521, 7
    %v523 = vsub.s32 %v520, %v522
    %v524 = vrot.slane %v423, %v523
    %vm525 = vcmask 130112
    %v526 = vsel %vm525, %v524, %v519
    %v527 = vadd.s32 %v515, 4294967280
    %v528 = vlaneseq
    %v529 = vshrl.u32 %v528, 7
    %v530 = vsub.s32 %v527, %v529
    %v531 = vrot.slane %v426, %v530
    %vm532 = vcmask 195712
    %v533 = vsel %vm532, %v531, %v526
    %v534 = vadd.s32 %v515, 4294967272
    %v535 = vlaneseq
    %v536 = vshrl.u32 %v535, 7
    %v537 = vsub.s32 %v534, %v536
    %v538 = vrot.slane %v429, %v537
    %vm539 = vcmask 261312
    %v540 = vsel %vm539, %v538, %v533
    %v541 = vadd.s32 %v515, 4294967264
    %v542 = vlaneseq
    %v543 = vshrl.u32 %v542, 7
    %v544 = vsub.s32 %v541, %v543
    %v545 = vrot.slane %v432, %v544
    %vm546 = vcmask 326912
    %v547 = vsel %vm546, %v545, %v540
    %v548 = vadd.s32 %v515, 4294967256
    %v549 = vlaneseq
    %v550 = vshrl.u32 %v549, 7
    %v551 = vsub.s32 %v548, %v550
    %v552 = vrot.slane %v435, %v551
    %vm553 = vcmask 392512
    %v554 = vsel %vm553, %v552, %v547
    %v555 = vadd.s32 %v515, 4294967248
    %v556 = vlaneseq
    %v557 = vshrl.u32 %v556, 7
    %v558 = vsub.s32 %v555, %v557
    %v559 = vrot.slane %v438, %v558
    %vm560 = vcmask 458112
    %v561 = vsel %vm560, %v559, %v554
    %v562 = vadd.s32 %v515, 4294967240
    %v563 = vlaneseq
    %v564 = vshrl.u32 %v563, 7
    %v565 = vsub.s32 %v562, %v564
    %v566 = vrot.slane %v441, %v565
    %vm567 = vcmask 523712
    %v568 = vsel %vm567, %v566, %v561
    %v569 = vlaneseq
    %v570 = vshrl.u32 %v569, 7
    %v571 = vsub.s32 %v515, %v570
    %v572 = vrot.slane %v444, %v571
    %v573 = vlaneseq
    %v574 = vshrl.u32 %v573, 7
    %v575 = vsub.s32 %v520, %v574
    %v576 = vrot.slane %v447, %v575
    %v577 = vsel %vm525, %v576, %v572
    %v578 = vlaneseq
    %v579 = vshrl.u32 %v578, 7
    %v580 = vsub.s32 %v527, %v579
    %v581 = vrot.slane %v450, %v580
    %v582 = vsel %vm532, %v581, %v577
    %v583 = vlaneseq
    %v584 = vshrl.u32 %v583, 7
    %v585 = vsub.s32 %v534, %v584
    %v586 = vrot.slane %v453, %v585
    %v587 = vsel %vm539, %v586, %v582
    %v588 = vlaneseq
    %v589 = vshrl.u32 %v588, 7
    %v590 = vsub.s32 %v541, %v589
    %v591 = vrot.slane %v456, %v590
    %v592 = vsel %vm546, %v591, %v587
    %v593 = vlaneseq
    %v594 = vshrl.u32 %v593, 7
    %v595 = vsub.s32 %v548, %v594
    %v596 = vrot.slane %v459, %v595
    %v597 = vsel %vm553, %v596, %v592
    %v598 = vlaneseq
    %v599 = vshrl.u32 %v598, 7
    %v600 = vsub.s32 %v555, %v599
    %v601 = vrot.slane %v462, %v600
    %v602 = vsel %vm560, %v601, %v597
    %v603 = vlaneseq
    %v604 = vshrl.u32 %v603, 7
    %v605 = vsub.s32 %v562, %v604
    %v606 = vrot.slane %v465, %v605
    %v607 = vsel %vm567, %v606, %v602
    %v608 = vlaneseq
    %v609 = vshrl.u32 %v608, 7
    %v610 = vsub.s32 %v515, %v609
    %v611 = vrot.slane %v468, %v610
    %v612 = vlaneseq
    %v613 = vshrl.u32 %v612, 7
    %v614 = vsub.s32 %v520, %v613
    %v615 = vrot.slane %v471, %v614
    %v616 = vsel %vm525, %v615, %v611
    %v617 = vlaneseq
    %v618 = vshrl.u32 %v617, 7
    %v619 = vsub.s32 %v527, %v618
    %v620 = vrot.slane %v474, %v619
    %v621 = vsel %vm532, %v620, %v616
    %v622 = vlaneseq
    %v623 = vshrl.u32 %v622, 7
    %v624 = vsub.s32 %v534, %v623
    %v625 = vrot.slane %v477, %v624
    %v626 = vsel %vm539, %v625, %v621
    %v627 = vlaneseq
    %v628 = vshrl.u32 %v627, 7
    %v629 = vsub.s32 %v541, %v628
    %v630 = vrot.slane %v480, %v629
    %v631 = vsel %vm546, %v630, %v626
    %v632 = vlaneseq
    %v633 = vshrl.u32 %v632, 7
    %v634 = vsub.s32 %v548, %v633
    %v635 = vrot.slane %v483, %v634
    %v636 = vsel %vm553, %v635, %v631
    %v637 = vlaneseq
    %v638 = vshrl.u32 %v637, 7
    %v639 = vsub.s32 %v555, %v638
    %v640 = vrot.slane %v486, %v639
    %v641 = vsel %vm560, %v640, %v636
    %v642 = vlaneseq
    %v643 = vshrl.u32 %v642, 7
    %v644 = vsub.s32 %v562, %v643
    %v645 = vrot.slane %v489, %v644
    %v646 = vsel %vm567, %v645, %v641
    %v647 = vlaneseq
    %v648 = vshrl.u32 %v647, 7
    %v649 = vsub.s32 %v515, %v648
    %v650 = vrot.slane %v492, %v649
    %v651 = vlaneseq
    %v652 = vshrl.u32 %v651, 7
    %v653 = vsub.s32 %v520, %v652
    %v654 = vrot.slane %v495, %v653
    %v655 = vsel %vm525, %v654, %v650
    %v656 = vlaneseq
    %v657 = vshrl.u32 %v656, 7
    %v658 = vsub.s32 %v527, %v657
    %v659 = vrot.slane %v498, %v658
    %v660 = vsel %vm532, %v659, %v655
    %v661 = vlaneseq
    %v662 = vshrl.u32 %v661, 7
    %v663 = vsub.s32 %v534, %v662
    %v664 = vrot.slane %v501, %v663
    %v665 = vsel %vm539, %v664, %v660
    %v666 = vlaneseq
    %v667 = vshrl.u32 %v666, 7
    %v668 = vsub.s32 %v541, %v667
    %v669 = vrot.slane %v504, %v668
    %v670 = vsel %vm546, %v669, %v665
    %v671 = vlaneseq
    %v672 = vshrl.u32 %v671, 7
    %v673 = vsub.s32 %v548, %v672
    %v674 = vrot.slane %v507, %v673
    %v675 = vsel %vm553, %v674, %v670
    %v676 = vlaneseq
    %v677 = vshrl.u32 %v676, 7
    %v678 = vsub.s32 %v555, %v677
    %v679 = vrot.slane %v510, %v678
    %v680 = vsel %vm560, %v679, %v675
    %v681 = vlaneseq
    %v682 = vshrl.u32 %v681, 7
    %v683 = vsub.s32 %v562, %v682
    %v684 = vrot.slane %v513, %v683
    %v685 = vsel %vm567, %v684, %v680
    %vm686 = vcmask 1041409
    %v687 = vsel %vm686, %v607, %v568
    %vm688 = vcmask 1042434
    %v689 = vsel %vm688, %v646, %v687
    %vm690 = vcmask 1043459
    %v691 = vsel %vm690, %v685, %v689
    %vm692 = vcmask 523264
    %v693 = vsel %vm692, %v691, 0
    %v696 = vsel %vm692, %v385, 0
    %698 = vmatprep.subr.mxu0 0.0
    %699 = vmatpush1.xpose.msra.mxu0 %v696
    %700 = vmatprep.subr.mxu0 0.0
    %701 = vmatpush1.xpose.msra.mxu0 0.0
    %702 = vmatprep.subr.mxu0 0.0
    %703 = vmatpush1.xpose.msra.mxu0 0.0
    %704 = vmatprep.subr.mxu0 0.0
    %705 = vmatpush1.xpose.msra.mxu0 0.0
    %706 = vmatprep.subr.mxu0 0.0
    %707 = vmatpush1.xpose.msra.mxu0 0.0
    %708 = vmatprep.subr.mxu0 0.0
    %709 = vmatpush1.xpose.msra.mxu0 0.0
    %710 = vmatprep.subr.mxu0 0.0
    %711 = vmatpush1.xpose.msra.mxu0 0.0
    %712 = vmatprep.subr.mxu0 0.0
    %713 = vmatpush1.xpose.msra.mxu0 0.0
    %714 = vmatprep.subr.mxu0 0.0
    %715 = vmatpush1.xpose.msra.mxu0 0.0
    %716 = vmatprep.subr.mxu0 0.0
    %717 = vmatpush1.xpose.msra.mxu0 0.0
    %718 = vmatprep.subr.mxu0 0.0
    %719 = vmatpush1.xpose.msra.mxu0 0.0
    %720 = vmatprep.subr.mxu0 0.0
    %721 = vmatpush1.xpose.msra.mxu0 0.0
    %722 = vmatprep.subr.mxu0 0.0
    %723 = vmatpush1.xpose.msra.mxu0 0.0
    %724 = vmatprep.subr.mxu0 0.0
    %725 = vmatpush1.xpose.msra.mxu0 0.0
    %726 = vmatprep.subr.mxu0 0.0
    %727 = vmatpush1.xpose.msra.mxu0 0.0
    %728 = vmatprep.subr.mxu0 0.0
    %729 = vmatpush1.xpose.msra.mxu0 0.0
    %730 = vmatprep.subr.mxu0 0.0
    %731 = vmatpush1.xpose.msra.mxu0 0.0
    %732 = vmatprep.subr.mxu0 0.0
    %733 = vmatpush1.xpose.msra.mxu0 0.0
    %734 = vmatprep.subr.mxu0 0.0
    %735 = vmatpush1.xpose.msra.mxu0 0.0
    %736 = vmatprep.subr.mxu0 0.0
    %737 = vmatpush1.xpose.msra.mxu0 0.0
    %738 = vmatprep.subr.mxu0 0.0
    %739 = vmatpush1.xpose.msra.mxu0 0.0
    %740 = vmatprep.subr.mxu0 0.0
    %741 = vmatpush1.xpose.msra.mxu0 0.0
    %742 = vmatprep.subr.mxu0 0.0
    %743 = vmatpush1.xpose.msra.mxu0 0.0
    %744 = vmatprep.subr.mxu0 0.0
    %745 = vmatpush1.xpose.msra.mxu0 0.0
    %746 = vmatprep.subr.mxu0 0.0
    %747 = vmatpush1.xpose.msra.mxu0 0.0
    %748 = vmatprep.subr.mxu0 0.0
    %749 = vmatpush1.xpose.msra.mxu0 0.0
    %750 = vmatprep.subr.mxu0 0.0
    %751 = vmatpush1.xpose.msra.mxu0 0.0
    %752 = vmatprep.subr.mxu0 0.0
    %753 = vmatpush1.xpose.msra.mxu0 0.0
    %754 = vmatprep.subr.mxu0 0.0
    %755 = vmatpush1.xpose.msra.mxu0 0.0
    %756 = vmatprep.subr.mxu0 0.0
    %757 = vmatpush1.xpose.msra.mxu0 0.0
    %758 = vmatprep.subr.mxu0 0.0
    %759 = vmatpush1.xpose.msra.mxu0 0.0
    %760 = vmatprep.subr.mxu0 0.0
    %761 = vmatpush1.xpose.msra.mxu0 0.0
    %762 = vmatprep.mubr.f32.mxu0 0.0
    %763 = vmatmul.mubr.f32.gmra.mrb[0].mxu0 %v693
    %v764 = vpop.f32.mrb[0].mxu0
    %v765 = vadd.f32 0.0, %v764
    %v766 = vpop.f32.mrb[0].mxu0
    %767 = vdwg.mxu0
    %v768 = vmax.f32 %v765, 0.0
    %v769 = vld [vmem:[%s3] sm:$0xf]
    %vm770 = vcmask 31744
    %v772 = vsel %vm770, %v768, 0
    %vm774 = vcmask 1043456
    %v776 = vsel %vm774, %v769, 0
    %778 = vmatprep.subr.mxu0 0.0
    %779 = vmatpush1.msra.mxu0 %v776
    %780 = vmatprep.subr.mxu0 0.0
    %781 = vmatpush1.msra.mxu0 0.0
    %782 = vmatprep.subr.mxu0 0.0
    %783 = vmatpush1.msra.mxu0 0.0
    %784 = vmatprep.subr.mxu0 0.0
    %785 = vmatpush1.msra.mxu0 0.0
    %786 = vmatprep.subr.mxu0 0.0
    %787 = vmatpush1.msra.mxu0 0.0
    %788 = vmatprep.subr.mxu0 0.0
    %789 = vmatpush1.msra.mxu0 0.0
    %790 = vmatprep.subr.mxu0 0.0
    %791 = vmatpush1.msra.mxu0 0.0
    %792 = vmatprep.subr.mxu0 0.0
    %793 = vmatpush1.msra.mxu0 0.0
    %794 = vmatprep.subr.mxu0 0.0
    %795 = vmatpush1.msra.mxu0 0.0
    %796 = vmatprep.subr.mxu0 0.0
    %797 = vmatpush1.msra.mxu0 0.0
    %798 = vmatprep.subr.mxu0 0.0
    %799 = vmatpush1.msra.mxu0 0.0
    %800 = vmatprep.subr.mxu0 0.0
    %801 = vmatpush1.msra.mxu0 0.0
    %802 = vmatprep.subr.mxu0 0.0
    %803 = vmatpush1.msra.mxu0 0.0
    %804 = vmatprep.subr.mxu0 0.0
    %805 = vmatpush1.msra.mxu0 0.0
    %806 = vmatprep.subr.mxu0 0.0
    %807 = vmatpush1.msra.mxu0 0.0
    %808 = vmatprep.subr.mxu0 0.0
    %809 = vmatpush1.msra.mxu0 0.0
    %810 = vmatprep.subr.mxu0 0.0
    %811 = vmatpush1.msra.mxu0 0.0
    %812 = vmatprep.subr.mxu0 0.0
    %813 = vmatpush1.msra.mxu0 0.0
    %814 = vmatprep.subr.mxu0 0.0
    %815 = vmatpush1.msra.mxu0 0.0
    %816 = vmatprep.subr.mxu0 0.0
    %817 = vmatpush1.msra.mxu0 0.0
    %818 = vmatprep.subr.mxu0 0.0
    %819 = vmatpush1.msra.mxu0 0.0
    %820 = vmatprep.subr.mxu0 0.0
    %821 = vmatpush1.msra.mxu0 0.0
    %822 = vmatprep.subr.mxu0 0.0
    %823 = vmatpush1.msra.mxu0 0.0
    %824 = vmatprep.subr.mxu0 0.0
    %825 = vmatpush1.msra.mxu0 0.0
    %826 = vmatprep.subr.mxu0 0.0
    %827 = vmatpush1.msra.mxu0 0.0
    %828 = vmatprep.subr.mxu0 0.0
    %829 = vmatpush1.msra.mxu0 0.0
    %830 = vmatprep.subr.mxu0 0.0
    %831 = vmatpush1.msra.mxu0 0.0
    %832 = vmatprep.subr.mxu0 0.0
    %833 = vmatpush1.msra.mxu0 0.0
    %834 = vmatprep.subr.mxu0 0.0
    %835 = vmatpush1.msra.mxu0 0.0
    %836 = vmatprep.subr.mxu0 0.0
    %837 = vmatpush1.msra.mxu0 0.0
    %838 = vmatprep.subr.mxu0 0.0
    %839 = vmatpush1.msra.mxu0 0.0
    %840 = vmatprep.subr.mxu0 0.0
    %841 = vmatpush1.msra.mxu0 0.0
    %842 = vmatprep.mubr.f32.mxu0 0.0
    %843 = vmatmul.mubr.f32.gmra.mrb[0].mxu0 %v772
    %v844 = vpop.f32.mrb[0].mxu0
    %v845 = vadd.f32 0.0, %v844
    %v846 = vpop.f32.mrb[0].mxu0
    %847 = vdwg.mxu0
    %v848 = vxor.u32 %v845, 2147483648
    %v849 = vmul.f32 %v848, 1.442695
    %v850 = vpow.pop %v849
    %v851 = vadd.f32 %v850, 1.0
    %v852 = vrcp.pop %v851
    %v853 = vmul.f32 1.0, %v852
    %v854 = vlaneseq
    %v855 = vshrl.u32 %v854, 7
    %v856 = vsub.s32 0, %v855
    %v857 = vrot.slane %v853, %v856
    %859 = vbcast.lane.b32.xlu0 %v857, 256
    %v860 = vpop.permute.xlu0 %859
    %s862 = sor.u32 256, 8
    %863 = vbcast.lane.b32.xlu0 %v857, %s862
    %v864 = vpop.permute.xlu0 %863
    %s866 = sor.u32 256, 16
    %867 = vbcast.lane.b32.xlu0 %v857, %s866
    %v868 = vpop.permute.xlu0 %867
    %s870 = sor.u32 256, 24
    %871 = vbcast.lane.b32.xlu0 %v857, %s870
    %v872 = vpop.permute.xlu0 %871
    %s874 = sor.u32 256, 32
    %875 = vbcast.lane.b32.xlu0 %v857, %s874
    %v876 = vpop.permute.xlu0 %875
    %s878 = sor.u32 256, 40
    %879 = vbcast.lane.b32.xlu0 %v857, %s878
    %v880 = vpop.permute.xlu0 %879
    %s882 = sor.u32 256, 48
    %883 = vbcast.lane.b32.xlu0 %v857, %s882
    %v884 = vpop.permute.xlu0 %883
    %s886 = sor.u32 256, 56
    %887 = vbcast.lane.b32.xlu0 %v857, %s886
    %v888 = vpop.permute.xlu0 %887
    %v889 = vlaneseq
    %v890 = vshrl.u32 %v889, 7
    %v891 = vsub.s32 1, %v890
    %v892 = vrot.slane %v853, %v891
    %894 = vbcast.lane.b32.xlu0 %v892, 256
    %v895 = vpop.permute.xlu0 %894
    %s897 = sor.u32 256, 8
    %898 = vbcast.lane.b32.xlu0 %v892, %s897
    %v899 = vpop.permute.xlu0 %898
    %s901 = sor.u32 256, 16
    %902 = vbcast.lane.b32.xlu0 %v892, %s901
    %v903 = vpop.permute.xlu0 %902
    %s905 = sor.u32 256, 24
    %906 = vbcast.lane.b32.xlu0 %v892, %s905
    %v907 = vpop.permute.xlu0 %906
    %s909 = sor.u32 256, 32
    %910 = vbcast.lane.b32.xlu0 %v892, %s909
    %v911 = vpop.permute.xlu0 %910
    %s913 = sor.u32 256, 40
    %914 = vbcast.lane.b32.xlu0 %v892, %s913
    %v915 = vpop.permute.xlu0 %914
    %s917 = sor.u32 256, 48
    %918 = vbcast.lane.b32.xlu0 %v892, %s917
    %v919 = vpop.permute.xlu0 %918
    %s921 = sor.u32 256, 56
    %922 = vbcast.lane.b32.xlu0 %v892, %s921
    %v923 = vpop.permute.xlu0 %922
    %v924 = vlaneseq
    %v925 = vshrl.u32 %v924, 7
    %v926 = vsub.s32 2, %v925
    %v927 = vrot.slane %v853, %v926
    %929 = vbcast.lane.b32.xlu0 %v927, 256
    %v930 = vpop.permute.xlu0 %929
    %s932 = sor.u32 256, 8
    %933 = vbcast.lane.b32.xlu0 %v927, %s932
    %v934 = vpop.permute.xlu0 %933
    %s936 = sor.u32 256, 16
    %937 = vbcast.lane.b32.xlu0 %v927, %s936
    %v938 = vpop.permute.xlu0 %937
    %s940 = sor.u32 256, 24
    %941 = vbcast.lane.b32.xlu0 %v927, %s940
    %v942 = vpop.permute.xlu0 %941
    %s944 = sor.u32 256, 32
    %945 = vbcast.lane.b32.xlu0 %v927, %s944
    %v946 = vpop.permute.xlu0 %945
    %s948 = sor.u32 256, 40
    %949 = vbcast.lane.b32.xlu0 %v927, %s948
    %v950 = vpop.permute.xlu0 %949
    %s952 = sor.u32 256, 48
    %953 = vbcast.lane.b32.xlu0 %v927, %s952
    %v954 = vpop.permute.xlu0 %953
    %s956 = sor.u32 256, 56
    %957 = vbcast.lane.b32.xlu0 %v927, %s956
    %v958 = vpop.permute.xlu0 %957
    %v959 = vlaneseq
    %v960 = vshrl.u32 %v959, 7
    %v961 = vsub.s32 3, %v960
    %v962 = vrot.slane %v853, %v961
    %964 = vbcast.lane.b32.xlu0 %v962, 256
    %v965 = vpop.permute.xlu0 %964
    %s967 = sor.u32 256, 8
    %968 = vbcast.lane.b32.xlu0 %v962, %s967
    %v969 = vpop.permute.xlu0 %968
    %s971 = sor.u32 256, 16
    %972 = vbcast.lane.b32.xlu0 %v962, %s971
    %v973 = vpop.permute.xlu0 %972
    %s975 = sor.u32 256, 24
    %976 = vbcast.lane.b32.xlu0 %v962, %s975
    %v977 = vpop.permute.xlu0 %976
    %s979 = sor.u32 256, 32
    %980 = vbcast.lane.b32.xlu0 %v962, %s979
    %v981 = vpop.permute.xlu0 %980
    %s983 = sor.u32 256, 40
    %984 = vbcast.lane.b32.xlu0 %v962, %s983
    %v985 = vpop.permute.xlu0 %984
    %s987 = sor.u32 256, 48
    %988 = vbcast.lane.b32.xlu0 %v962, %s987
    %v989 = vpop.permute.xlu0 %988
    %s991 = sor.u32 256, 56
    %992 = vbcast.lane.b32.xlu0 %v962, %s991
    %v993 = vpop.permute.xlu0 %992
    %v994 = vmul.f32 %v32, %v860
    %v995 = vmul.f32 %v33, %v860
    %v996 = vmul.f32 %v34, %v864
    %v997 = vmul.f32 %v35, %v864
    %v998 = vmul.f32 %v36, %v868
    %v999 = vmul.f32 %v37, %v868
    %v1000 = vmul.f32 %v38, %v872
    %v1001 = vmul.f32 %v39, %v872
    %v1002 = vmul.f32 %v40, %v876
    %v1003 = vmul.f32 %v41, %v876
    %v1004 = vmul.f32 %v42, %v880
    %v1005 = vmul.f32 %v43, %v880
    %v1006 = vmul.f32 %v44, %v884
    %v1007 = vmul.f32 %v45, %v884
    %v1008 = vmul.f32 %v46, %v888
    %v1009 = vmul.f32 %v47, %v888
    %v1010 = vmul.f32 %v48, %v895
    %v1011 = vmul.f32 %v49, %v895
    %v1012 = vmul.f32 %v50, %v899
    %v1013 = vmul.f32 %v51, %v899
    %v1014 = vmul.f32 %v52, %v903
    %v1015 = vmul.f32 %v53, %v903
    %v1016 = vmul.f32 %v54, %v907
    %v1017 = vmul.f32 %v55, %v907
    %v1018 = vmul.f32 %v56, %v911
    %v1019 = vmul.f32 %v57, %v911
    %v1020 = vmul.f32 %v58, %v915
    %v1021 = vmul.f32 %v59, %v915
    %v1022 = vmul.f32 %v60, %v919
    %v1023 = vmul.f32 %v61, %v919
    %v1024 = vmul.f32 %v62, %v923
    %v1025 = vmul.f32 %v63, %v923
    %v1026 = vmul.f32 %v64, %v930
    %v1027 = vmul.f32 %v65, %v930
    %v1028 = vmul.f32 %v66, %v934
    %v1029 = vmul.f32 %v67, %v934
    %v1030 = vmul.f32 %v68, %v938
    %v1031 = vmul.f32 %v69, %v938
    %v1032 = vmul.f32 %v70, %v942
    %v1033 = vmul.f32 %v71, %v942
    %v1034 = vmul.f32 %v72, %v946
    %v1035 = vmul.f32 %v73, %v946
    %v1036 = vmul.f32 %v74, %v950
    %v1037 = vmul.f32 %v75, %v950
    %v1038 = vmul.f32 %v76, %v954
    %v1039 = vmul.f32 %v77, %v954
    %v1040 = vmul.f32 %v78, %v958
    %v1041 = vmul.f32 %v79, %v958
    %v1042 = vmul.f32 %v80, %v965
    %v1043 = vmul.f32 %v81, %v965
    %v1044 = vmul.f32 %v82, %v969
    %v1045 = vmul.f32 %v83, %v969
    %v1046 = vmul.f32 %v84, %v973
    %v1047 = vmul.f32 %v85, %v973
    %v1048 = vmul.f32 %v86, %v977
    %v1049 = vmul.f32 %v87, %v977
    %v1050 = vmul.f32 %v88, %v981
    %v1051 = vmul.f32 %v89, %v981
    %v1052 = vmul.f32 %v90, %v985
    %v1053 = vmul.f32 %v91, %v985
    %v1054 = vmul.f32 %v92, %v989
    %v1055 = vmul.f32 %v93, %v989
    %v1056 = vmul.f32 %v94, %v993
    %v1057 = vmul.f32 %v95, %v993
    %1058 = vst [vmem:[#allocation5] sm:$0xff] %v994
    %1059 = vst [vmem:[#allocation5 + $0x8] sm:$0xff] %v995
    %1060 = vst [vmem:[#allocation5 + $0x10] sm:$0xff] %v996
    %1061 = vst [vmem:[#allocation5 + $0x18] sm:$0xff] %v997
    %1062 = vst [vmem:[#allocation5 + $0x20] sm:$0xff] %v998
    %1063 = vst [vmem:[#allocation5 + $0x28] sm:$0xff] %v999
    %1064 = vst [vmem:[#allocation5 + $0x30] sm:$0xff] %v1000
    %1065 = vst [vmem:[#allocation5 + $0x38] sm:$0xff] %v1001
    %1066 = vst [vmem:[#allocation5 + $0x40] sm:$0xff] %v1002
    %1067 = vst [vmem:[#allocation5 + $0x48] sm:$0xff] %v1003
    %1068 = vst [vmem:[#allocation5 + $0x50] sm:$0xff] %v1004
    %1069 = vst [vmem:[#allocation5 + $0x58] sm:$0xff] %v1005
    %1070 = vst [vmem:[#allocation5 + $0x60] sm:$0xff] %v1006
    %1071 = vst [vmem:[#allocation5 + $0x68] sm:$0xff] %v1007
    %1072 = vst [vmem:[#allocation5 + $0x70] sm:$0xff] %v1008
    %1073 = vst [vmem:[#allocation5 + $0x78] sm:$0xff] %v1009
    %1074 = vst [vmem:[#allocation5 + $0x80] sm:$0xff] %v1010
    %1075 = vst [vmem:[#allocation5 + $0x88] sm:$0xff] %v1011
    %1076 = vst [vmem:[#allocation5 + $0x90] sm:$0xff] %v1012
    %1077 = vst [vmem:[#allocation5 + $0x98] sm:$0xff] %v1013
    %1078 = vst [vmem:[#allocation5 + $0xa0] sm:$0xff] %v1014
    %1079 = vst [vmem:[#allocation5 + $0xa8] sm:$0xff] %v1015
    %1080 = vst [vmem:[#allocation5 + $0xb0] sm:$0xff] %v1016
    %1081 = vst [vmem:[#allocation5 + $0xb8] sm:$0xff] %v1017
    %1082 = vst [vmem:[#allocation5 + $0xc0] sm:$0xff] %v1018
    %1083 = vst [vmem:[#allocation5 + $0xc8] sm:$0xff] %v1019
    %1084 = vst [vmem:[#allocation5 + $0xd0] sm:$0xff] %v1020
    %1085 = vst [vmem:[#allocation5 + $0xd8] sm:$0xff] %v1021
    %1086 = vst [vmem:[#allocation5 + $0xe0] sm:$0xff] %v1022
    %1087 = vst [vmem:[#allocation5 + $0xe8] sm:$0xff] %v1023
    %1088 = vst [vmem:[#allocation5 + $0xf0] sm:$0xff] %v1024
    %1089 = vst [vmem:[#allocation5 + $0xf8] sm:$0xff] %v1025
    %1090 = vst [vmem:[#allocation5 + $0x100] sm:$0xff] %v1026
    %1091 = vst [vmem:[#allocation5 + $0x108] sm:$0xff] %v1027
    %1092 = vst [vmem:[#allocation5 + $0x110] sm:$0xff] %v1028
    %1093 = vst [vmem:[#allocation5 + $0x118] sm:$0xff] %v1029
    %1094 = vst [vmem:[#allocation5 + $0x120] sm:$0xff] %v1030
    %1095 = vst [vmem:[#allocation5 + $0x128] sm:$0xff] %v1031
    %1096 = vst [vmem:[#allocation5 + $0x130] sm:$0xff] %v1032
    %1097 = vst [vmem:[#allocation5 + $0x138] sm:$0xff] %v1033
    %1098 = vst [vmem:[#allocation5 + $0x140] sm:$0xff] %v1034
    %1099 = vst [vmem:[#allocation5 + $0x148] sm:$0xff] %v1035
    %1100 = vst [vmem:[#allocation5 + $0x150] sm:$0xff] %v1036
    %1101 = vst [vmem:[#allocation5 + $0x158] sm:$0xff] %v1037
    %1102 = vst [vmem:[#allocation5 + $0x160] sm:$0xff] %v1038
    %1103 = vst [vmem:[#allocation5 + $0x168] sm:$0xff] %v1039
    %1104 = vst [vmem:[#allocation5 + $0x170] sm:$0xff] %v1040
    %1105 = vst [vmem:[#allocation5 + $0x178] sm:$0xff] %v1041
    %1106 = vst [vmem:[#allocation5 + $0x180] sm:$0xff] %v1042
    %1107 = vst [vmem:[#allocation5 + $0x188] sm:$0xff] %v1043
    %1108 = vst [vmem:[#allocation5 + $0x190] sm:$0xff] %v1044
    %1109 = vst [vmem:[#allocation5 + $0x198] sm:$0xff] %v1045
    %1110 = vst [vmem:[#allocation5 + $0x1a0] sm:$0xff] %v1046
    %1111 = vst [vmem:[#allocation5 + $0x1a8] sm:$0xff] %v1047
    %1112 = vst [vmem:[#allocation5 + $0x1b0] sm:$0xff] %v1048
    %1113 = vst [vmem:[#allocation5 + $0x1b8] sm:$0xff] %v1049
    %1114 = vst [vmem:[#allocation5 + $0x1c0] sm:$0xff] %v1050
    %1115 = vst [vmem:[#allocation5 + $0x1c8] sm:$0xff] %v1051
    %1116 = vst [vmem:[#allocation5 + $0x1d0] sm:$0xff] %v1052
    %1117 = vst [vmem:[#allocation5 + $0x1d8] sm:$0xff] %v1053
    %1118 = vst [vmem:[#allocation5 + $0x1e0] sm:$0xff] %v1054
    %1119 = vst [vmem:[#allocation5 + $0x1e8] sm:$0xff] %v1055
    %1120 = vst [vmem:[#allocation5 + $0x1f0] sm:$0xff] %v1056
    %1121 = vst [vmem:[#allocation5 + $0x1f8] sm:$0xff] %v1057
    // Predicated region
    $region22: #{tpu_custom_call.1} parent=1 // pred_check
      _
    $region23: #{tpu_custom_call.1} parent=1 // pred_check_branch
      %1123 = sbr.rel (0) target = $region25
    $region24: #{tpu_custom_call.1} parent=1 // pred_region
      %s1125 = ssub.s32 8192, 8192
      %1126 = vsyncadd [#allocation4], %s1125
      %s1127 = sshll.u32 [#allocation5], 4
      %s1128 = int_to_ptr.vmem [resolvable:$true] %s1127
      %1133 = dma.vmem_to_hbm [thread:$0]  %s1128, 8192, %s4, [#allocation4], 256, 256, 16
    $region25: #{tpu_custom_call.1} parent=1 // pred_fallthru
      _
    // Predicated region
    $region26: #{tpu_custom_call.1} parent=1 // pred_check
      _
    $region27: #{tpu_custom_call.1} parent=1 // pred_check_branch
      %1135 = sbr.rel (0) target = $region29
    $region28: #{tpu_custom_call.1} parent=1 // pred_region
      %1136 = dma.done [#allocation4], 8192
    $region29: #{tpu_custom_call.1} parent=1 // pred_fallthru
      _
    %1137 = vsyncpa [#allocation3], 1
    %1138 = vsyncpa [#allocation4], 1

</llo_original>
